<compile_context>
chip_gen: v5e
topology: v5e:2x2
jax: 0.10.0
libtpu: 0.0.40
codegen_flags: <defaults>
</compile_context>

<pallas_src>
import math

import jax
import jax.numpy as jnp
from jax import lax
from jax.experimental import pallas as pl
from jax.experimental.pallas import tpu as pltpu

_LANES = 128
_MAX_TILE_ROWS = 4096   # 4096*128*4 B = 2 MiB per f32 tile; x2 buffers per input fits every gen


def _row_tile(rows):
    """Tile height for a (rows, 128) slab: big multiple-of-8 tile, or the full dim."""
    return _MAX_TILE_ROWS if rows >= _MAX_TILE_ROWS else rows


def _mask_rows(vals, valid_rows):
    """Zero out rows >= valid_rows (ragged last block; OOB rows are unspecified)."""
    row = lax.broadcasted_iota(jnp.int32, vals.shape, 0)
    return jnp.where(row < valid_rows, vals, 0.0)


def _make_kernel(spc, nz, z_tile, z_rows, nl, l_tile, l_rows):
    """Build the streaming-reduction kernel with all extents baked in statically."""
    rem_z = z_rows - (nz - 1) * z_tile                      # valid rows in last z block
    rem_l = (l_rows - (nl - 1) * l_tile) if l_rows > 0 else 0

    def kernel(z_ref, ldj_ref, out_ref, acc_zz, acc_ldj):
        j = pl.program_id(1)
        g = pl.program_id(0) * spc + j                      # global row-block id

        @pl.when(j == 0)
        def _init():
            acc_zz[...] = jnp.zeros_like(acc_zz)
            acc_ldj[...] = jnp.zeros_like(acc_ldj)

        # ---- sum(z * z) over this tile -----------------------------------
        def z_contrib(mask_to=None):
            z = z_ref[...].astype(jnp.float32)
            zz = z * z
            if mask_to is not None:
                zz = _mask_rows(zz, mask_to)
            acc_zz[...] = acc_zz[...] + jnp.sum(zz, axis=0, keepdims=True)

        if rem_z == z_tile:                                  # no ragged z block
            pl.when(g < nz)(z_contrib)
        else:
            pl.when(g < nz - 1)(z_contrib)
            pl.when(g == nz - 1)(lambda: z_contrib(rem_z))

        # ---- sum(log_det_J) over this tile --------------------------------
        if l_rows > 0:
            def l_contrib(mask_to=None):
                v = ldj_ref[...].astype(jnp.float32)
                if mask_to is not None:
                    v = _mask_rows(v, mask_to)
                acc_ldj[...] = acc_ldj[...] + jnp.sum(v, axis=0, keepdims=True)

            if rem_l == l_tile:
                pl.when(g < nl)(l_contrib)
            else:
                pl.when(g < nl - 1)(l_contrib)
                pl.when(g == nl - 1)(lambda: l_contrib(rem_l))

        # ---- one output write per core ------------------------------------
        @pl.when(j == spc - 1)
        def _finalize():
            out_ref[0, 0:1, :] = acc_zz[...]
            out_ref[0, 1:2, :] = acc_ldj[...]

    return kernel


@jax.jit
def iris_loss(z, log_det_J):
    """z: [B, D] latents, log_det_J: [B] -> {'loss', 'log_likelihood', 'log_det'}."""
    ldj = log_det_J.reshape(-1)
    batch = ldj.shape[0]
    n_z = z.size
    event_dim = n_z // batch                                 # D the prior reduces over

    z_flat = z.reshape(-1)
    zr = n_z // _LANES                                        # full 128-lane rows of z
    lr = batch // _LANES                                      # full 128-lane rows of ldj

    if zr == 0:
        # Too small to fill even one 128-lane row -> trivial pure-JAX path
        # (the demo shapes below never take this branch).
        sum_zz = jnp.sum(z_flat.astype(jnp.float32) ** 2)
        sum_ldj = jnp.sum(ldj.astype(jnp.float32))
    else:
        # --- lane-dense prefixes, no pad materialisation -------------------
        z2d = z_flat[: zr * _LANES].reshape(zr, _LANES)
        z_tile = _row_tile(zr)
        nz = pl.cdiv(zr, z_tile)

        if lr > 0:
            ldj2d = ldj[: lr * _LANES].reshape(lr, _LANES)
            l_tile = _row_tile(lr)
            nl = pl.cdiv(lr, l_tile)
        else:
            # ldj smaller than one lane row: dummy slab (never accumulated),
            # whole ldj handled by the wrapper tail below.
            ldj2d = jnp.zeros((8, _LANES), jnp.float32)
            l_tile, nl = 8, 1

        spc = pl.cdiv(nz, 2)                                  # grid steps per TensorCore
        kernel = _make_kernel(spc, nz, z_tile, zr, nl, l_tile, lr)

        partials = pl.pallas_call(
            kernel,
            out_shape=jax.ShapeDtypeStruct((2, 2, _LANES), jnp.float32),
            grid_spec=pltpu.PrefetchScalarGridSpec(
                num_scalar_prefetch=0,
                grid=(2, spc),
                in_specs=[
                    pl.BlockSpec((z_tile, _LANES),
                                 lambda c, i: (jnp.minimum(c * spc + i, nz - 1), 0)),
                    pl.BlockSpec((l_tile, _LANES),
                                 lambda c, i: (jnp.minimum(c * spc + i, nl - 1), 0)),
                ],
                out_specs=pl.BlockSpec((1, 2, _LANES), lambda c, i: (c, 0, 0)),
                scratch_shapes=[pltpu.VMEM((1, _LANES), jnp.float32),
                                pltpu.VMEM((1, _LANES), jnp.float32)],
            ),
            compiler_params=pltpu.CompilerParams(
                dimension_semantics=("parallel", "arbitrary")),
        )(z2d, ldj2d)

        sum_zz = jnp.sum(partials[:, 0, :])
        sum_ldj = jnp.sum(partials[:, 1, :])

        # --- <128-element tails (static sizes), folded in by XLA ------------
        if zr * _LANES < n_z:
            zt = z_flat[zr * _LANES:].astype(jnp.float32)
            sum_zz = sum_zz + jnp.sum(zt * zt)
        if lr * _LANES < batch:
            sum_ldj = sum_ldj + jnp.sum(ldj[lr * _LANES:].astype(jnp.float32))

    # --- finalize (tiny scalar math, fused by XLA) --------------------------
    inv_b = 1.0 / batch
    log_det = sum_ldj * inv_b
    log_likelihood = (-0.5 * inv_b) * sum_zz \
                     - 0.5 * event_dim * math.log(2.0 * math.pi) + log_det
    return {
        "loss": -log_likelihood,
        "log_likelihood": log_likelihood,
        "log_det": log_det,
    }


def _reference(z, log_det_J):
    d = z.shape[-1]
    log_p_z = -0.5 * jnp.sum(z * z, axis=-1) - 0.5 * d * math.log(2.0 * math.pi)
    log_p_x = log_p_z + log_det_J
    return {
        "loss": jnp.mean(-log_p_x),
        "log_likelihood": jnp.mean(log_p_x),
        "log_det": jnp.mean(log_det_J),
    }


if __name__ == "__main__":
    key = jax.random.PRNGKey(0)

    # Iris: D = 4 latent features.  (70, 4) exercises the non-128-divisible tail path.
    for (B, D) in [(64, 4), (70, 4)]:
        kz, kj = jax.random.split(jax.random.fold_in(key, B))
        z = jax.random.normal(kz, (B, D), dtype=jnp.float32)
        log_det_J = jax.random.normal(kj, (B,), dtype=jnp.float32)

        out = iris_loss(z, log_det_J)
        jax.block_until_ready(out)

        ref = _reference(z, log_det_J)
        for k in out:
            assert jnp.allclose(out[k], ref[k], atol=1e-5, rtol=1e-5), \
                (B, D, k, out[k], ref[k])

    print("KERNEL_OK")
</pallas_src>

<mosaic_0001>
module attributes {stable_mosaic.version = 11 : i64} {
  func.func @kernel(%arg0: i32, %arg1: i32, %arg2: memref<2x128xf32, #tpu.memory_space<vmem>>, %arg3: memref<8x128xf32, #tpu.memory_space<vmem>>, %arg4: memref<1x2x128xf32, #tpu.memory_space<vmem>>, %arg5: memref<1x128xf32, #tpu.memory_space<vmem>>, %arg6: memref<1x128xf32, #tpu.memory_space<vmem>>) attributes {dimension_semantics = [#tpu.dimension_semantics<parallel>, #tpu.dimension_semantics<arbitrary>], iteration_bounds = array<i64: 2, 1>, scalar_prefetch = 0 : i64, scratch_operands = 2 : i64, tpu.core_type = #tpu.core_type<tc>, window_params = [{transform_indices = @transform_0, window_bounds = array<i64: 2, 128>}, {transform_indices = @transform_1, window_bounds = array<i64: 8, 128>}, {transform_indices = @transform_2, window_bounds = array<i64: 1, 2, 128>}]} {
    %c1_i32 = arith.constant 1 : i32
    %0 = arith.muli %arg0, %c1_i32 : i32
    %1 = arith.addi %0, %arg1 : i32
    %c0_i32 = arith.constant 0 : i32
    %2 = arith.cmpi eq, %arg1, %c0_i32 : i32
    %3 = arith.extui %2 : i1 to i32
    %c0_i32_0 = arith.constant 0 : i32
    %4 = arith.cmpi ne, %3, %c0_i32_0 : i32
    scf.if %4 {
      %cst = arith.constant 0.000000e+00 : f32
      %11 = vector.broadcast %cst : f32 to vector<1x128xf32>
      %c0 = arith.constant 0 : index
      %c0_5 = arith.constant 0 : index
      %12 = vector.load %arg5[%c0, %c0_5] : memref<1x128xf32, #tpu.memory_space<vmem>>, vector<1x128xf32>
      tpu.vector_store %arg5[%c0, %c0_5], %11 {strides = array<i32>} : memref<1x128xf32, #tpu.memory_space<vmem>>, vector<1x128xf32>,
      %cst_6 = arith.constant 0.000000e+00 : f32
      %13 = vector.broadcast %cst_6 : f32 to vector<1x128xf32>
      %c0_7 = arith.constant 0 : index
      %c0_8 = arith.constant 0 : index
      %14 = vector.load %arg6[%c0_7, %c0_8] : memref<1x128xf32, #tpu.memory_space<vmem>>, vector<1x128xf32>
      tpu.vector_store %arg6[%c0_7, %c0_8], %13 {strides = array<i32>} : memref<1x128xf32, #tpu.memory_space<vmem>>, vector<1x128xf32>,
    } else {
    }
    %c1_i32_1 = arith.constant 1 : i32
    %5 = arith.cmpi slt, %1, %c1_i32_1 : i32
    %6 = arith.extui %5 : i1 to i32
    %c0_i32_2 = arith.constant 0 : i32
    %7 = arith.cmpi ne, %6, %c0_i32_2 : i32
    scf.if %7 {
      %c0 = arith.constant 0 : index
      %c0_5 = arith.constant 0 : index
      %11 = vector.load %arg2[%c0, %c0_5] : memref<2x128xf32, #tpu.memory_space<vmem>>, vector<2x128xf32>
      %12 = arith.mulf %11, %11 : vector<2x128xf32>
      %c0_6 = arith.constant 0 : index
      %c0_7 = arith.constant 0 : index
      %13 = vector.load %arg5[%c0_6, %c0_7] : memref<1x128xf32, #tpu.memory_space<vmem>>, vector<1x128xf32>
      %cst = arith.constant dense<0.000000e+00> : vector<128xf32>
      %14 = vector.multi_reduction <add>, %12, %cst [0] : vector<2x128xf32> to vector<128xf32>
      %15 = vector.shape_cast %14 : vector<128xf32> to vector<1x128xf32>
      %16 = arith.addf %13, %15 : vector<1x128xf32>
      %c0_8 = arith.constant 0 : index
      %c0_9 = arith.constant 0 : index
      %17 = vector.load %arg5[%c0_8, %c0_9] : memref<1x128xf32, #tpu.memory_space<vmem>>, vector<1x128xf32>
      tpu.vector_store %arg5[%c0_8, %c0_9], %16 {strides = array<i32>} : memref<1x128xf32, #tpu.memory_space<vmem>>, vector<1x128xf32>,
    } else {
    }
    %c0_i32_3 = arith.constant 0 : i32
    %8 = arith.cmpi eq, %arg1, %c0_i32_3 : i32
    %9 = arith.extui %8 : i1 to i32
    %c0_i32_4 = arith.constant 0 : i32
    %10 = arith.cmpi ne, %9, %c0_i32_4 : i32
    scf.if %10 {
      %c0 = arith.constant 0 : index
      %c0_5 = arith.constant 0 : index
      %11 = vector.load %arg5[%c0, %c0_5] : memref<1x128xf32, #tpu.memory_space<vmem>>, vector<1x128xf32>
      %c0_6 = arith.constant 0 : index
      %c0_7 = arith.constant 0 : index
      %c0_8 = arith.constant 0 : index
      %12 = vector.load %arg4[%c0_6, %c0_7, %c0_8] : memref<1x2x128xf32, #tpu.memory_space<vmem>>, vector<1x1x128xf32>
      %13 = vector.shape_cast %12 : vector<1x1x128xf32> to vector<1x128xf32>
      %14 = vector.shape_cast %11 : vector<1x128xf32> to vector<1x1x128xf32>
      tpu.vector_store %arg4[%c0_6, %c0_7, %c0_8], %14 {strides = array<i32>} : memref<1x2x128xf32, #tpu.memory_space<vmem>>, vector<1x1x128xf32>,
      %c0_9 = arith.constant 0 : index
      %c0_10 = arith.constant 0 : index
      %15 = vector.load %arg6[%c0_9, %c0_10] : memref<1x128xf32, #tpu.memory_space<vmem>>, vector<1x128xf32>
      %c0_11 = arith.constant 0 : index
      %c1 = arith.constant 1 : index
      %c0_12 = arith.constant 0 : index
      %16 = vector.load %arg4[%c0_11, %c1, %c0_12] : memref<1x2x128xf32, #tpu.memory_space<vmem>>, vector<1x1x128xf32>
      %17 = vector.shape_cast %16 : vector<1x1x128xf32> to vector<1x128xf32>
      %18 = vector.shape_cast %15 : vector<1x128xf32> to vector<1x1x128xf32>
      tpu.vector_store %arg4[%c0_11, %c1, %c0_12], %18 {strides = array<i32>} : memref<1x2x128xf32, #tpu.memory_space<vmem>>, vector<1x1x128xf32>,
    } else {
    }
    return
  }
  func.func @transform_0(%arg0: i32, %arg1: i32) -> (i32, i32) {
    %c1_i32 = arith.constant 1 : i32
    %0 = arith.muli %arg0, %c1_i32 : i32
    %1 = arith.addi %0, %arg1 : i32
    %c0_i32 = arith.constant 0 : i32
    %2 = arith.minsi %1, %c0_i32 : i32
    %c0_i32_0 = arith.constant 0 : i32
    %c0_i32_1 = arith.constant 0 : i32
    return %2, %c0_i32_0 : i32, i32
  }
  func.func @transform_1(%arg0: i32, %arg1: i32) -> (i32, i32) {
    %c1_i32 = arith.constant 1 : i32
    %0 = arith.muli %arg0, %c1_i32 : i32
    %1 = arith.addi %0, %arg1 : i32
    %c0_i32 = arith.constant 0 : i32
    %2 = arith.minsi %1, %c0_i32 : i32
    %c0_i32_0 = arith.constant 0 : i32
    %c0_i32_1 = arith.constant 0 : i32
    return %2, %c0_i32_0 : i32, i32
  }
  func.func @transform_2(%arg0: i32, %arg1: i32) -> (i32, i32, i32) {
    %c0_i32 = arith.constant 0 : i32
    %c0_i32_0 = arith.constant 0 : i32
    %c0_i32_1 = arith.constant 0 : i32
    return %arg0, %c0_i32, %c0_i32_0 : i32, i32, i32
  }
}

</mosaic_0001>

<llo_original>
// kernel: iris_loss.1
$region0: #{iris_loss.1}
  #allocation0 [shape = 'u32[]', space=smem, size = 0x4, offset = 0x4, fixed_abs, tag = 'smem constant byte address 0x4 - core index']
  #allocation1 [shape = 'u32[72,128]{1,0:T(1,128)}', space=vmem, size = 0x9000, scoped, tag = 'internal scratch']
  #allocation2 [shape = 'f32[1,128]{1,0:T(1,128)}', space=vmem, size = 0x200, scoped, tag = 'scratch operand']
  #allocation3 [shape = 'f32[1,128]{1,0:T(1,128)}', space=vmem, size = 0x200, scoped, tag = 'scratch operand']
  %s0 = inlined_call_operand.vmem [shape: f32[2,128], index: 0, kind: input, shape index: {}]
  %s1 = inlined_call_operand.vmem [shape: f32[8,128], index: 1, kind: input, shape index: {}]
  %s2 = inlined_call_operand.vmem [shape: f32[2,2,128], index: 2, kind: output, shape index: {}]
  %s3 = sld [smem:[#allocation0]]
  $region53: #{iris_loss.1} parent=0
    _
  %s5 = ssub.s32 1, %s3
  %s6 = scalar_select 0, %s5, %s3
  loop: start=0, step=1, limit=4
  $region2: #{iris_loss.1} parent=0 // loop_pre_header
    _
  $region3: #{iris_loss.1} parent=0 // loop_header
    %s8 = sphi 0, %s12
    %p9 = scmp.ge.s32.totalorder %s8, 4
    %s15 = sphi 0, %s27
    %s16 = sphi 0, %s23
    %s17 = sphi 0, %s15
    %s18 = sphi 0, %s16
    %s19 = sphi 0, %s17
    %s20 = sphi 0, %s18
    %s36 = sphi 0, %s38
    %s39 = sphi 0, %s36
    %s40 = sphi 0, %s39
    %s56 = sphi 0, %s40
    %s68 = sphi 0, %s70
    %s71 = sphi 0, %s68
    %s72 = sphi 0, %s71
    %s88 = sphi 0, %s72
    %s94 = sphi 0, %s96
    %s97 = sphi 0, %s94
    %s98 = sphi 0, %s97
    %s114 = sphi 0, %s98
  $region4: #{iris_loss.1} parent=0 // loop_header_branch
    %11 = sbr.rel (%p9) target = $region8
  $region5: #{iris_loss.1} parent=0 // loop_body
    %s13 = ssub.s32 %s8, 1
    %s14 = ssub.s32 %s8, 2
    %s21 = sadd.s32 1, %s16
    %p22 = scmp.ge.s32.totalorder %s21, 1
    %s23 = scalar_select %p22, 0, %s21
    %s24 = sadd.s32 1, %s15
    %s25 = scalar_select %p22, %s24, %s15
    %p26 = scmp.ge.s32.totalorder %s25, 2
    %s27 = scalar_select %p26, 0, %s25
    %s28 = sadd.s32 %s15, %s16
    %p29 = scmp.lt.s32.totalorder %s28, 0
    %s30 = scalar_select %p29, %s28, 0
    %s31 = sadd.s32 %s27, %s23
    %p32 = scmp.lt.s32.totalorder %s31, 0
    %s33 = scalar_select %p32, %s31, 0
    %s34 = ssub.s32 %s30, %s33
    %p35 = scmp.eq.s32.totalorder %s34, 0
    %s37 = sadd.s32 %s36, 1
    %s38 = scalar_select %p35, %s36, %s37
    %p41 = pneg %p35
    %p42 = scmp.eq.s32.totalorder %s8, 1
    %p43 = por %p41, %p42
    %p44 = scmp.ne.s32.totalorder %s36, %s39
    %p45 = scmp.eq.s32.totalorder %s8, 0
    %p46 = por %p44, %p45
    %p47 = scmp.ne.s32.totalorder %s36, %s39
    %p48 = scmp.eq.s32.totalorder %s13, 1
    %p49 = por %p47, %p48
    %p50 = scmp.ne.s32.totalorder %s39, %s40
    %p51 = scmp.eq.s32.totalorder %s13, 0
    %p52 = por %p50, %p51
    %p53 = scmp.ne.s32.totalorder %s39, %s40
    %p54 = scmp.eq.s32.totalorder %s14, 1
    %p55 = por %p53, %p54
    %p57 = scmp.ne.s32.totalorder %s40, %s56
    %p58 = scmp.eq.s32.totalorder %s14, 0
    %p59 = por %p57, %p58
    %s60 = sadd.s32 %s15, %s16
    %p61 = scmp.lt.s32.totalorder %s60, 0
    %s62 = scalar_select %p61, %s60, 0
    %s63 = sadd.s32 %s27, %s23
    %p64 = scmp.lt.s32.totalorder %s63, 0
    %s65 = scalar_select %p64, %s63, 0
    %s66 = ssub.s32 %s62, %s65
    %p67 = scmp.eq.s32.totalorder %s66, 0
    %s69 = sadd.s32 %s68, 1
    %s70 = scalar_select %p67, %s68, %s69
    %p73 = pneg %p67
    %p74 = scmp.eq.s32.totalorder %s8, 1
    %p75 = por %p73, %p74
    %p76 = scmp.ne.s32.totalorder %s68, %s71
    %p77 = scmp.eq.s32.totalorder %s8, 0
    %p78 = por %p76, %p77
    %p79 = scmp.ne.s32.totalorder %s68, %s71
    %p80 = scmp.eq.s32.totalorder %s13, 1
    %p81 = por %p79, %p80
    %p82 = scmp.ne.s32.totalorder %s71, %s72
    %p83 = scmp.eq.s32.totalorder %s13, 0
    %p84 = por %p82, %p83
    %p85 = scmp.ne.s32.totalorder %s71, %s72
    %p86 = scmp.eq.s32.totalorder %s14, 1
    %p87 = por %p85, %p86
    %p89 = scmp.ne.s32.totalorder %s72, %s88
    %p90 = scmp.eq.s32.totalorder %s14, 0
    %p91 = por %p89, %p90
    %s92 = ssub.s32 %s15, %s27
    %p93 = scmp.eq.s32.totalorder %s92, 0
    %s95 = sadd.s32 %s94, 1
    %s96 = scalar_select %p93, %s94, %s95
    %p99 = pneg %p93
    %p100 = scmp.eq.s32.totalorder %s8, 1
    %p101 = por %p99, %p100
    %p102 = scmp.ne.s32.totalorder %s94, %s97
    %p103 = scmp.eq.s32.totalorder %s8, 0
    %p104 = por %p102, %p103
    %p105 = scmp.ne.s32.totalorder %s94, %s97
    %p106 = scmp.eq.s32.totalorder %s13, 1
    %p107 = por %p105, %p106
    %p108 = scmp.ne.s32.totalorder %s97, %s98
    %p109 = scmp.eq.s32.totalorder %s13, 0
    %p110 = por %p108, %p109
    %p111 = scmp.ne.s32.totalorder %s97, %s98
    %p112 = scmp.eq.s32.totalorder %s14, 1
    %p113 = por %p111, %p112
    %p115 = scmp.ne.s32.totalorder %s98, %s114
    %p116 = scmp.eq.s32.totalorder %s14, 0
    %p117 = por %p115, %p116
    %p118 = scmp.le.s32.totalorder 1, %s8
    %p119 = scmp.lt.s32.totalorder %s8, 3
    %p120 = pnand %p118, %p119
    %p121 = pneg %p120
    // Predicated region
    $region9: #{iris_loss.1} parent=5 // pred_check
      _
    $region10: #{iris_loss.1} parent=5 // pred_check_branch
      %123 = sbr.rel (%p120) target = $region12
    $region11: #{iris_loss.1} parent=5 // pred_region
      %s124 = ssub.s32 %s8, 1
    $region12: #{iris_loss.1} parent=5 // pred_fallthru
      _
    %p125 = scmp.lt.s32.totalorder %s8, 2
    // Predicated region
    $region13: #{iris_loss.1} parent=5 // pred_check
      %p126 = pneg %p125
    $region14: #{iris_loss.1} parent=5 // pred_check_branch
      %128 = sbr.rel (%p126) target = $region16
    $region15: #{iris_loss.1} parent=5 // pred_region
      // Predicated region
      $region17: #{iris_loss.1} parent=15 // pred_check
        %p129 = pneg %p46
      $region18: #{iris_loss.1} parent=15 // pred_check_branch
        %131 = sbr.rel (%p129) target = $region20
      $region19: #{iris_loss.1} parent=15 // pred_region
        %s132 = sadd.s32 %s15, %s16
        %p133 = scmp.lt.s32.totalorder %s132, 0
        %s134 = scalar_select %p133, %s132, 0
        %p135 = scmp.lt.s32.totalorder %s134, 0
        %s136 = scalar_select %p135, %s134, 0
        %s137 = smul.addr %s136, 2
        %s138 = scalar_lea.vmem %s0, %s137
        %s139 = sadd.s32 %s15, %s16
        %p140 = scmp.lt.s32.totalorder %s139, 0
        %s141 = scalar_select %p140, %s139, 0
      $region20: #{iris_loss.1} parent=15 // pred_fallthru
        _
      // Predicated region
      $region21: #{iris_loss.1} parent=15 // pred_check
        %p142 = pneg %p78
      $region22: #{iris_loss.1} parent=15 // pred_check_branch
        %144 = sbr.rel (%p142) target = $region24
      $region23: #{iris_loss.1} parent=15 // pred_region
        %s145 = sadd.s32 %s15, %s16
        %p146 = scmp.lt.s32.totalorder %s145, 0
        %s147 = scalar_select %p146, %s145, 0
        %p148 = scmp.lt.s32.totalorder %s147, 0
        %s149 = scalar_select %p148, %s147, 0
        %s150 = smul.addr %s149, 8
        %s151 = scalar_lea.vmem %s1, %s150
        %s152 = sadd.s32 %s15, %s16
        %p153 = scmp.lt.s32.totalorder %s152, 0
        %s154 = scalar_select %p153, %s152, 0
      $region24: #{iris_loss.1} parent=15 // pred_fallthru
        _
    $region16: #{iris_loss.1} parent=5 // pred_fallthru
      _
    %p155 = scmp.le.s32.totalorder 1, %s8
    %p156 = scmp.lt.s32.totalorder %s8, 3
    %p157 = pnand %p155, %p156
    %p158 = pneg %p157
    // Predicated region
    $region25: #{iris_loss.1} parent=5 // pred_check
      _
    $region26: #{iris_loss.1} parent=5 // pred_check_branch
      %160 = sbr.rel (%p157) target = $region28
    $region27: #{iris_loss.1} parent=5 // pred_region
      %s161 = ssub.s32 %s8, 1
      %s162 = sadd.s32 %s17, %s18
      %p163 = scmp.lt.s32.totalorder %s162, 0
      %s164 = scalar_select %p163, %s162, 0
      %p165 = scmp.lt.s32.totalorder %s164, 0
      %s166 = scalar_select %p165, %s164, 0
      %s167 = smul.addr %s166, 2
      %s168 = scalar_lea.vmem %s0, %s167
      %p169 = pneg %p52
      %p170 = pneg %p49
      %s171 = sadd.s32 %s17, %s18
      %p172 = scmp.lt.s32.totalorder %s171, 0
      %s173 = scalar_select %p172, %s171, 0
      %p174 = scmp.lt.s32.totalorder %s173, 0
      %s175 = scalar_select %p174, %s173, 0
      %s176 = smul.addr %s175, 8
      %s177 = scalar_lea.vmem %s1, %s176
      %p178 = pneg %p84
      %p179 = pneg %p81
      %p180 = pneg %p110
      %p181 = pneg %p107
      %p182 = scmp.lt.s32.totalorder %s17, 1
      %s183 = scalar_select %p182, %s17, 1
      %s184 = smul.addr %s183, 2
      %s185 = scalar_lea.vmem %s2, %s184
      %s186 = sadd.s32 %s17, %s18
      %p187 = scmp.lt.s32.totalorder %s186, 0
      %s188 = scalar_select %p187, %s186, 0
      %p189 = scmp.lt.s32.totalorder %s188, 0
      %s190 = scalar_select %p189, %s188, 0
      %s191 = smul.addr %s190, 2
      %s192 = scalar_lea.vmem %s0, %s191
      %s193 = sadd.s32 %s17, %s18
      %p194 = scmp.lt.s32.totalorder %s193, 0
      %s195 = scalar_select %p194, %s193, 0
      %s196 = sadd.s32 %s17, %s18
      %p197 = scmp.lt.s32.totalorder %s196, 0
      %s198 = scalar_select %p197, %s196, 0
      %p199 = scmp.lt.s32.totalorder %s198, 0
      %s200 = scalar_select %p199, %s198, 0
      %s201 = smul.addr %s200, 8
      %s202 = scalar_lea.vmem %s1, %s201
      %s203 = sadd.s32 %s17, %s18
      %p204 = scmp.lt.s32.totalorder %s203, 0
      %s205 = scalar_select %p204, %s203, 0
      %p206 = scmp.lt.s32.totalorder %s17, 1
      %s207 = scalar_select %p206, %s17, 1
      %s208 = smul.addr %s207, 2
      %s209 = scalar_lea.vmem %s2, %s208
      %s210 = sadd.s32 %s17, %s18
      %p211 = scmp.eq.s32.totalorder %s18, 0
      // Predicated region
      $region29: #{iris_loss.1} parent=27 // pred_check
        %p212 = pneg %p211
      $region30: #{iris_loss.1} parent=27 // pred_check_branch
        %214 = sbr.rel (%p212) target = $region32
      $region31: #{iris_loss.1} parent=27 // pred_region
        %215 = vst [vmem:[#allocation2] sm:$0x1] 0.0
        %216 = vst [vmem:[#allocation3] sm:$0x1] 0.0
      $region32: #{iris_loss.1} parent=27 // pred_fallthru
        _
      %p217 = scmp.lt.s32.totalorder %s210, 1
      // Predicated region
      $region33: #{iris_loss.1} parent=27 // pred_check
        %p218 = pneg %p217
      $region34: #{iris_loss.1} parent=27 // pred_check_branch
        %220 = sbr.rel (%p218) target = $region36
      $region35: #{iris_loss.1} parent=27 // pred_region
        %v221 = vld [vmem:[%s192] sm:$0x3]
        %v222 = vmul.f32 %v221, %v221
        %v223 = vld [vmem:[#allocation2] sm:$0x1]
        %vm224 = vcmask 1041408
        %v225 = vsel %vm224, %v222, 0.0
        %v226 = vrot.slane %v225, 4
        %v227 = vadd.f32 %v225, %v226
        %v228 = vrot.slane %v227, 2
        %v229 = vadd.f32 %v227, %v228
        %v230 = vrot.slane %v229, 1
        %v231 = vadd.f32 %v229, %v230
        %v232 = vadd.f32 %v223, %v231
        %233 = vst [vmem:[#allocation2] sm:$0x1] %v232
      $region36: #{iris_loss.1} parent=27 // pred_fallthru
        _
      // Predicated region
      $region37: #{iris_loss.1} parent=27 // pred_check
        %p234 = pneg %p211
      $region38: #{iris_loss.1} parent=27 // pred_check_branch
        %236 = sbr.rel (%p234) target = $region40
      $region39: #{iris_loss.1} parent=27 // pred_region
        %v237 = vld [vmem:[#allocation2] sm:$0x1]
        %238 = vst [vmem:[%s209] sm:$0x1] %v237
        %v239 = vld [vmem:[#allocation3] sm:$0x1]
        %240 = vst [vmem:[%s209 + $0x1] sm:$0x1] %v239
      $region40: #{iris_loss.1} parent=27 // pred_fallthru
        _
      %p241 = scmp.lt.s32.totalorder %s17, 1
      %s242 = scalar_select %p241, %s17, 1
      %s243 = smul.addr %s242, 2
      %s244 = scalar_lea.vmem %s2, %s243
      // Predicated region
      $region41: #{iris_loss.1} parent=27 // pred_check
        %p245 = pneg %p107
      $region42: #{iris_loss.1} parent=27 // pred_check_branch
        %247 = sbr.rel (%p245) target = $region44
      $region43: #{iris_loss.1} parent=27 // pred_region
        _
      $region44: #{iris_loss.1} parent=27 // pred_fallthru
        _
    $region28: #{iris_loss.1} parent=5 // pred_fallthru
      _
    %p248 = scmp.le.s32.totalorder 2, %s8
    // Predicated region
    $region45: #{iris_loss.1} parent=5 // pred_check
      %p249 = pneg %p248
    $region46: #{iris_loss.1} parent=5 // pred_check_branch
      %251 = sbr.rel (%p249) target = $region48
    $region47: #{iris_loss.1} parent=5 // pred_region
      %s252 = ssub.s32 %s8, 2
      // Predicated region
      $region49: #{iris_loss.1} parent=47 // pred_check
        %p253 = pneg %p113
      $region50: #{iris_loss.1} parent=47 // pred_check_branch
        %255 = sbr.rel (%p253) target = $region52
      $region51: #{iris_loss.1} parent=47 // pred_region
        %p256 = scmp.lt.s32.totalorder %s19, 1
        %s257 = scalar_select %p256, %s19, 1
        %s258 = smul.addr %s257, 2
        %s259 = scalar_lea.vmem %s2, %s258
      $region52: #{iris_loss.1} parent=47 // pred_fallthru
        _
    $region48: #{iris_loss.1} parent=5 // pred_fallthru
      _
  $region6: #{iris_loss.1} parent=0 // loop_footer
    %s12 = sadd.s32 1, %s8
  $region7: #{iris_loss.1} parent=0 // loop_footer_branch
    %7 = sbr.rel target = $region3
  $region8: #{iris_loss.1} parent=0 // loop_exit
    _

</llo_original>
